<compile_context>
chip_gen: v6e
topology: v6e:2x2x1
jax: 0.10.0
libtpu: 0.0.40
codegen_flags: <defaults>
</compile_context>

<pallas_src>
import functools

import jax
import jax.numpy as jnp
from jax.experimental import pallas as pl
from jax.experimental.pallas import tpu as pltpu


def _round_up(a, b):
    return (a + b - 1) // b * b


def _segment_sum(xp, n_seg, seg_len):
    """Per-segment sum along the last axis, accumulating in f32.

    n_seg == 1: plain last-axis reduction (XLU).
    n_seg  > 1: (rows, n_seg*seg_len) @ (n_seg*seg_len, n_seg) 0/1 matmul on
                the MXU (idle in this kernel), which is also lane-dense.
    """
    if n_seg == 1:
        return jnp.sum(xp, axis=-1, keepdims=True, dtype=jnp.float32)
    k = n_seg * seg_len
    col = jax.lax.broadcasted_iota(jnp.int32, (k, n_seg), 0) // seg_len
    seg = jax.lax.broadcasted_iota(jnp.int32, (k, n_seg), 1)
    sel = (col == seg).astype(xp.dtype)
    return jnp.dot(xp, sel, preferred_element_type=jnp.float32)


def _gem_kernel_int_p(x_ref, o_ref, *, eps, inv_hw, p_int, n_seg, seg_len,
                      compute_dtype, clamp):
    """Fast path: p is a small static positive integer -> pure VPU pow."""
    x = x_ref[...].astype(compute_dtype)
    xc = jnp.maximum(x, jnp.asarray(eps, compute_dtype)) if clamp else x
    xp = xc
    for _ in range(p_int - 1):              # multiply chain, no per-elem EUP
        xp = xp * xc
    mean = _segment_sum(xp, n_seg, seg_len) * inv_hw       # f32
    # finalize: one exp/log pair per row, negligible vs. the per-element work
    out = mean if p_int == 1 else jnp.exp(jnp.log(mean) * (1.0 / p_int))
    o_ref[...] = out.astype(o_ref.dtype)


def _gem_kernel_generic(p_ref, x_ref, o_ref, *, eps, inv_hw, n_seg, seg_len):
    """Generic path: p is a runtime scalar, scalar-prefetched into SMEM."""
    p = p_ref[0]
    x = x_ref[...].astype(jnp.float32)
    xc = jnp.maximum(x, eps)                 # clamp(min=eps)
    xp = jnp.exp(p * jnp.log(xc))            # x ** p on the EUP
    mean = _segment_sum(xp, n_seg, seg_len) * inv_hw
    out = jnp.exp(jnp.log(mean) * (1.0 / p))  # mean ** (1/p)
    o_ref[...] = out.astype(o_ref.dtype)


def _pick_row_tile(rows_k, hw_k, target_bytes=4 * 1024 * 1024):
    """Row tile so each lane-padded, f32-equivalent input block ~= target.

    Sizing uses the lane-padded row width (Mosaic pads the last dim to a
    multiple of 128 lanes) and 4 bytes/elem (in-kernel f32 intermediates), so
    the double-buffered footprint plus temporaries stays well inside the
    32 MiB scoped-VMEM limit requested below on v5e/v6e/v7x.
    """
    padded_row_bytes = _round_up(hw_k, 128) * 4
    rt = max(8, (target_bytes // padded_row_bytes) // 8 * 8)
    rt = min(rt, _round_up(rows_k, 8))
    # Prefer >= 4 grid steps when rows allow, so each of the two v7x
    # TensorCores gets >= 2 steps and can overlap DMA with compute.
    if _round_up(rows_k, 8) // 8 >= 4:
        while pl.cdiv(rows_k, rt) < 4 and rt > 8:
            rt = max(8, (rt // 2) // 8 * 8)
    return rt


def gem_pallas(x, p, eps=1e-6, *, static_int_p=None, row_tile=None,
               assume_nonneg=False):
    """GeM pooling.  x: (N, C, H, W), p: (1,)-float -> (N, C, 1, 1).

    static_int_p: if given, the per-element pow is specialized to a multiply
      chain (no per-element transcendentals).  The value must agree with the
      runtime `p`; this is verified whenever `p` is a concrete array.
    assume_nonneg: skip the clamp in the fast path for inputs known >= eps
      (e.g. post-ReLU features); only changes results for values below eps.
    """
    N, C, H, W = x.shape
    rows = N * C
    hw = H * W

    # Lane packing for small spatial extents (hw < 128).
    n_seg = 1
    if hw < 128:
        L = 128 // hw
        if L > 1 and rows % L == 0:
            n_seg = L
    rows_k = rows // n_seg
    hw_k = hw * n_seg
    x2d = x.reshape(rows_k, hw_k)

    if row_tile is None:
        row_tile = _pick_row_tile(rows_k, hw_k)
    grid = (pl.cdiv(rows_k, row_tile),)
    inv_hw = 1.0 / hw

    use_int_path = (
        static_int_p is not None
        and float(static_int_p) == int(static_int_p)
        and 1 <= int(static_int_p) <= 8)

    if use_int_path:
        # Guard against silently ignoring a runtime p that disagrees.
        try:
            p_val = float(jnp.reshape(p, (-1,))[0])
            if abs(p_val - int(static_int_p)) > 1e-6:
                raise ValueError(
                    f"static_int_p={static_int_p} disagrees with runtime "
                    f"p={p_val}")
        except jax.errors.ConcretizationTypeError:
            pass  # p is traced; the caller guarantees consistency.

    itemsize = x.dtype.itemsize
    out_shape = jax.ShapeDtypeStruct((rows_k, n_seg), x.dtype)
    compiler_params = pltpu.CompilerParams(
        dimension_semantics=("parallel",),
        vmem_limit_bytes=32 * 1024 * 1024)

    if use_int_path:
        p_int = int(static_int_p)
        compute_dtype = jnp.bfloat16 if x.dtype == jnp.bfloat16 else jnp.float32
        kernel = functools.partial(
            _gem_kernel_int_p, eps=eps, inv_hw=inv_hw, p_int=p_int,
            n_seg=n_seg, seg_len=hw, compute_dtype=compute_dtype,
            clamp=not assume_nonneg)
        grid_spec = pltpu.PrefetchScalarGridSpec(
            num_scalar_prefetch=0,
            grid=grid,
            in_specs=[pl.BlockSpec((row_tile, hw_k), lambda i: (i, 0))],
            out_specs=pl.BlockSpec((row_tile, n_seg), lambda i: (i, 0)))
        cost = pl.CostEstimate(
            flops=rows * hw * (p_int + 2),
            transcendentals=2 * rows,
            bytes_accessed=rows * hw * itemsize + rows * itemsize)
        args = (x2d,)
    else:
        kernel = functools.partial(
            _gem_kernel_generic, eps=eps, inv_hw=inv_hw, n_seg=n_seg,
            seg_len=hw)
        grid_spec = pltpu.PrefetchScalarGridSpec(
            num_scalar_prefetch=1,           # p lands in SMEM before the grid
            grid=grid,
            in_specs=[pl.BlockSpec((row_tile, hw_k), lambda i, p_ref: (i, 0))],
            out_specs=pl.BlockSpec((row_tile, n_seg),
                                   lambda i, p_ref: (i, 0)))
        cost = pl.CostEstimate(
            flops=rows * hw * 4,
            transcendentals=2 * rows * hw + 2 * rows,
            bytes_accessed=rows * hw * itemsize + rows * itemsize)
        args = (p.astype(jnp.float32), x2d)

    out2d = pl.pallas_call(
        kernel,
        out_shape=out_shape,
        grid_spec=grid_spec,
        compiler_params=compiler_params,
        cost_estimate=cost,
    )(*args)

    return out2d.reshape(N, C, 1, 1)


def gem_reference(x, p, eps=1e-6):
    """Plain-JAX reference matching the PyTorch forward."""
    xc = jnp.maximum(x, eps)
    xp = xc ** p[0]
    pooled = jnp.mean(xp, axis=(-2, -1), keepdims=True)
    return pooled ** (1.0 / p[0])


if __name__ == "__main__":
    key = jax.random.PRNGKey(0)
    eps = 1e-6
    # Deterministic parameter init, matching nn.Parameter(torch.ones(1) * 3).
    p = jnp.ones((1,), dtype=jnp.float32) * 3.0

    def check(x, name):
        ref = gem_reference(x, p, eps)
        # Fast path: static integer exponent (module default p=3 -> VPU x*x*x).
        out_fast = jax.block_until_ready(gem_pallas(x, p, eps, static_int_p=3))
        # Generic path: p read at runtime from SMEM (learnable-parameter case).
        out_gen = jax.block_until_ready(gem_pallas(x, p, eps))
        assert out_fast.shape == ref.shape, (name, out_fast.shape, ref.shape)
        assert out_gen.shape == ref.shape, (name, out_gen.shape, ref.shape)
        assert jnp.allclose(out_fast, ref, rtol=2e-5, atol=1e-6), (
            name, float(jnp.max(jnp.abs(out_fast - ref))))
        assert jnp.allclose(out_gen, ref, rtol=1e-4, atol=1e-6), (
            name, float(jnp.max(jnp.abs(out_gen - ref))))

    # Primary shape (hw >= 128): plain (N*C, H*W) rows, XLU row reduction.
    x1 = jax.random.uniform(jax.random.fold_in(key, 0), (2, 4, 16, 16),
                            dtype=jnp.float32, minval=0.0, maxval=2.0)
    check(x1, "16x16")

    # Small-spatial shape (hw < 128): lane-packed rows + MXU segment-sum.
    x2 = jax.random.uniform(jax.random.fold_in(key, 1), (2, 8, 7, 7),
                            dtype=jnp.float32, minval=0.0, maxval=2.0)
    check(x2, "7x7")

    print("KERNEL_OK")
</pallas_src>

<mosaic_0001>
module attributes {stable_mosaic.version = 11 : i64} {
  func.func @_gem_kernel_int_p(%arg0: i32, %arg1: memref<8x256xf32, #tpu.memory_space<vmem>>, %arg2: memref<8x1xf32, #tpu.memory_space<vmem>>) attributes {dimension_semantics = [#tpu.dimension_semantics<parallel>], iteration_bounds = array<i64: 1>, scalar_prefetch = 0 : i64, scratch_operands = 0 : i64, tpu.core_type = #tpu.core_type<tc>, window_params = [{transform_indices = @transform_0, window_bounds = array<i64: 8, 256>}, {transform_indices = @transform_1, window_bounds = array<i64: 8, 1>}]} {
    %c0 = arith.constant 0 : index
    %c0_0 = arith.constant 0 : index
    %0 = vector.load %arg1[%c0, %c0_0] : memref<8x256xf32, #tpu.memory_space<vmem>>, vector<8x256xf32>
    %cst = arith.constant 9.99999997E-7 : f32
    %1 = vector.broadcast %cst : f32 to vector<8x256xf32>
    %2 = arith.maximumf %0, %1 : vector<8x256xf32>
    %3 = arith.mulf %2, %2 : vector<8x256xf32>
    %4 = arith.mulf %3, %2 : vector<8x256xf32>
    %cst_1 = arith.constant dense<0.000000e+00> : vector<8xf32>
    %5 = vector.multi_reduction <add>, %4, %cst_1 [1] : vector<8x256xf32> to vector<8xf32>
    %6 = vector.shape_cast %5 : vector<8xf32> to vector<8x1xf32>
    %cst_2 = arith.constant 3.906250e-03 : f32
    %7 = vector.broadcast %cst_2 : f32 to vector<8x1xf32>
    %8 = arith.mulf %6, %7 : vector<8x1xf32>
    %9 = math.log %8 : vector<8x1xf32>
    %cst_3 = arith.constant 0.333333343 : f32
    %10 = vector.broadcast %cst_3 : f32 to vector<8x1xf32>
    %11 = arith.mulf %9, %10 : vector<8x1xf32>
    %12 = math.exp %11 : vector<8x1xf32>
    %c0_4 = arith.constant 0 : index
    %c0_5 = arith.constant 0 : index
    %13 = vector.load %arg2[%c0_4, %c0_5] : memref<8x1xf32, #tpu.memory_space<vmem>>, vector<8x1xf32>
    tpu.vector_store %arg2[%c0_4, %c0_5], %12 {strides = array<i32>} : memref<8x1xf32, #tpu.memory_space<vmem>>, vector<8x1xf32>,
    return
  }
  func.func @transform_0(%arg0: i32) -> (i32, i32) {
    %c0_i32 = arith.constant 0 : i32
    %c0_i32_0 = arith.constant 0 : i32
    return %arg0, %c0_i32 : i32, i32
  }
  func.func @transform_1(%arg0: i32) -> (i32, i32) {
    %c0_i32 = arith.constant 0 : i32
    %c0_i32_0 = arith.constant 0 : i32
    return %arg0, %c0_i32 : i32, i32
  }
}

</mosaic_0001>

<llo_original>
// kernel: tpu_custom_call.1
$region0: #{tpu_custom_call.1}
  #allocation0 [shape = 'u32[]', space=smem, size = 0x4, offset = 0x4, fixed_abs, tag = 'smem constant byte address 0x4 - core index']
  #allocation1 [shape = 'u32[144,128]{1,0:T(1,128)}', space=vmem, size = 0x12000, scoped, tag = 'internal scratch']
  %s0 = inlined_call_operand.hbm [shape: f32[8,256], index: 0, kind: input, shape index: {}]
  %s1 = inlined_call_operand.vmem [shape: f32[8,1], index: 1, kind: output, shape index: {}]
  %s2 = sld [smem:[#allocation0]]
  $region18: #{tpu_custom_call.1} parent=0
    _
  %s4 = ssub.s32 1, %s2
  %s5 = scalar_select 0, %s4, %s2
  $region1: #{tpu_custom_call.1} parent=0
    #allocation2 [shape = 'u8[8192]{0}', space=vmem, size = 0x2000, scoped, tag = 'input window, operand 0, single buffered']
    #allocation3 [shape = 's32[1]{0}', space=sflag, size = 0x4, scoped, tag = 'scoped memory for tpu_custom_call.1']
    %6 = vsyncpa [#allocation3], 0
    // Predicated region
    $region2: #{tpu_custom_call.1} parent=1 // pred_check
      _
    $region3: #{tpu_custom_call.1} parent=1 // pred_check_branch
      %8 = sbr.rel (0) target = $region5
    $region4: #{tpu_custom_call.1} parent=1 // pred_region
      %s10 = ssub.s32 256, 256
      %11 = vsyncadd [#allocation3], %s10
      %s13 = sshll.u32 [#allocation2], 4
      %s14 = int_to_ptr.vmem [resolvable:$true] %s13
      %16 = dma.hbm_to_vmem [thread:$0]  %s0, 256, %s14, [#allocation3]
    $region5: #{tpu_custom_call.1} parent=1 // pred_fallthru
      _
    // Predicated region
    $region6: #{tpu_custom_call.1} parent=1 // pred_check
      _
    $region7: #{tpu_custom_call.1} parent=1 // pred_check_branch
      %18 = sbr.rel (0) target = $region9
    $region8: #{tpu_custom_call.1} parent=1 // pred_region
      %19 = dma.done [#allocation3], 256
    $region9: #{tpu_custom_call.1} parent=1 // pred_fallthru
      _
    %v20 = vld [vmem:[#allocation2] sm:$0xff]
    %v21 = vld [vmem:[#allocation2 + $0x8] sm:$0xff]
    %v22 = vmax.f32 %v20, 1e-06
    %v23 = vmax.f32 %v21, 1e-06
    %v24 = vmul.f32 %v22, %v22
    %v25 = vmul.f32 %v23, %v23
    %v26 = vmul.f32 %v24, %v22
    %v27 = vmul.f32 %v25, %v23
    %v28 = vadd.f32 %v26, %v27
    %29 = vadd.xlane.f32.xlu0 %v28
    %v30 = vpop.xlane.xlu0 %29
    %v31 = vmul.f32 %v30, 0.00390625
    %v32 = vlog2.pop %v31
    %v33 = vmul.f32 %v32, 0.6931472
    %v34 = vmul.f32 %v33, 0.33333334
    %v35 = vmul.f32 %v34, 1.442695
    %v36 = vpow.pop %v35
    %vm37 = vcmask 7168
    %38 = vst.msk [vmem:[%s1] sm:$0xff] %vm37, %v36
    // Predicated region
    $region10: #{tpu_custom_call.1} parent=1 // pred_check
      _
    $region11: #{tpu_custom_call.1} parent=1 // pred_check_branch
      %40 = sbr.rel (0) target = $region13
    $region12: #{tpu_custom_call.1} parent=1 // pred_region
      _
    $region13: #{tpu_custom_call.1} parent=1 // pred_fallthru
      _
    // Predicated region
    $region14: #{tpu_custom_call.1} parent=1 // pred_check
      _
    $region15: #{tpu_custom_call.1} parent=1 // pred_check_branch
      %42 = sbr.rel (0) target = $region17
    $region16: #{tpu_custom_call.1} parent=1 // pred_region
      _
    $region17: #{tpu_custom_call.1} parent=1 // pred_fallthru
      _
    %43 = vsyncpa [#allocation3], 1

</llo_original>
